<compile_context>
chip_gen: v7x
topology: tpu7x:2x2x1
jax: 0.10.0
libtpu: 0.0.40
codegen_flags: <defaults>
</compile_context>

<pallas_src>
import functools

import jax
import jax.numpy as jnp
from jax import lax
from jax.experimental import pallas as pl
from jax.experimental.pallas import tpu as pltpu


def _conv_block_kernel(x_ref, w_ref, p_ref, o_ref, *, groups, l_logical, eps,
                       mxu_dtype):
    """One grid step == one batch sample.

    x_ref : (1, C_in, L_pad)   input sample, NCL (channels on sublanes, L on lanes)
    w_ref : (3, C_out, C_in)   conv weights, one (C_out, C_in) matrix per tap
    p_ref : (3, C_out, 1)      fused [bias, gamma, beta]
    o_ref : (1, C_out, L_pad)  output block (lane-dense)
    """
    c_in = x_ref.shape[1]
    l_pad = x_ref.shape[2]
    c_out = o_ref.shape[1]
    cg = c_out // groups

    x = x_ref[0]                                            # (C_in, L_pad)
    lane_in = lax.broadcasted_iota(jnp.int32, (c_in, l_pad), 1)
    zero = jnp.zeros((), dtype=x.dtype)

    # Shifted taps via XLU rotate + edge mask (== conv zero padding).
    # With L_pad > L the wrapped-around lane is already a zero pad lane;
    # the masks also cover the L_pad == L (no padding) case.
    x_m1 = jnp.where(lane_in == 0, zero, pltpu.roll(x, shift=1, axis=1))
    x_p1 = jnp.where(lane_in == l_logical - 1, zero,
                     pltpu.roll(x, shift=l_pad - 1, axis=1))

    feed = x.dtype if mxu_dtype is None else mxu_dtype
    y = (
        jnp.dot(w_ref[0].astype(feed), x_m1.astype(feed),
                preferred_element_type=jnp.float32)
        + jnp.dot(w_ref[1].astype(feed), x.astype(feed),
                  preferred_element_type=jnp.float32)
        + jnp.dot(w_ref[2].astype(feed), x_p1.astype(feed),
                  preferred_element_type=jnp.float32)
    )                                                       # (C_out, L_pad) f32

    bias = p_ref[0].astype(jnp.float32)                     # (C_out, 1)
    gamma = p_ref[1].astype(jnp.float32)
    beta = p_ref[2].astype(jnp.float32)
    y = y + bias

    # Mask padded lanes out of the GroupNorm statistics (compile-time branch).
    if l_pad != l_logical:
        lane_out = lax.broadcasted_iota(jnp.int32, (c_out, l_pad), 1)
        y_stat = jnp.where(lane_out < l_logical, y, 0.0)
    else:
        y_stat = y

    inv_n = 1.0 / float(cg * l_logical)
    for g in range(groups):                                 # static, small
        lo = g * cg
        yg = y[lo:lo + cg, :]                               # (cg, L_pad)
        yg_s = y_stat[lo:lo + cg, :]
        row_sum = jnp.sum(yg_s, axis=1, keepdims=True)      # (cg, 1) lane reduce
        row_sq = jnp.sum(yg_s * yg_s, axis=1, keepdims=True)
        mean = jnp.sum(row_sum, axis=0, keepdims=True) * inv_n    # (1, 1)
        ex2 = jnp.sum(row_sq, axis=0, keepdims=True) * inv_n      # (1, 1)
        var = jnp.maximum(ex2 - mean * mean, 0.0)
        rstd = lax.rsqrt(var + eps)
        scale = gamma[lo:lo + cg, :] * rstd                  # (cg, 1)
        shift = beta[lo:lo + cg, :] - mean * scale           # (cg, 1)
        yn = yg * scale + shift                              # (cg, L_pad)
        # SiLU (sigmoid goes to the EUP slot).
        o_ref[0, lo:lo + cg, :] = (yn * jax.nn.sigmoid(yn)).astype(o_ref.dtype)


def conv_block_forward(x_ncl, w_oik, bias, gamma, beta, *, groups=1, eps=1e-5,
                       mxu_dtype=None):
    """x_ncl: (B, C_in, L) like PyTorch Conv1d input.  Returns (B, C_out, L).

    mxu_dtype: optional dtype to feed the MXU with (e.g. jnp.bfloat16 on
    v6e/v7x); accumulation stays f32.  None keeps the input dtype.
    """
    B, c_in, L = x_ncl.shape
    c_out = w_oik.shape[0]
    assert w_oik.shape == (c_out, c_in, 3)
    assert c_out % groups == 0

    # Lane-dense sequence axis: pad L up to a multiple of 128 (stats masked
    # inside the kernel, output sliced back below).
    l_pad = ((L + 127) // 128) * 128
    x_in = x_ncl if l_pad == L else jnp.pad(x_ncl, ((0, 0), (0, 0), (0, l_pad - L)))

    # Per-tap weight matrices: w_taps[k] = W[:, :, k]  -> (3, C_out, C_in).
    w_taps = jnp.transpose(w_oik, (2, 0, 1))
    # Fused per-channel parameters in one block: [bias, gamma, beta].
    params = jnp.stack([bias, gamma, beta], axis=0).reshape(3, c_out, 1)

    # VMEM budget: double-buffered blocks + live f32 temps (itemsize-correct),
    # capped below physical VMEM with headroom for compiler scratch / sems.
    isz = lambda a: jnp.dtype(a.dtype).itemsize
    block_bytes = (c_in * l_pad * isz(x_in)
                   + 3 * c_out * c_in * isz(w_taps)
                   + 3 * c_out * isz(params)
                   + c_out * l_pad * isz(x_in))
    f32_temps = (3 * c_in * l_pad + 4 * c_out * l_pad) * 4
    est = 2 * block_bytes + f32_temps
    try:
        vmem_cap = int(pltpu.get_tpu_info().vmem_capacity_bytes)
    except Exception:
        vmem_cap = 64 * 1024 * 1024
    vmem_limit = int(min(max(est + (4 << 20), 32 << 20), vmem_cap - (8 << 20)))

    kernel = functools.partial(_conv_block_kernel, groups=groups, l_logical=L,
                               eps=eps, mxu_dtype=mxu_dtype)

    out = pl.pallas_call(
        kernel,
        out_shape=jax.ShapeDtypeStruct((B, c_out, l_pad), x_ncl.dtype),
        grid_spec=pltpu.PrefetchScalarGridSpec(
            num_scalar_prefetch=0,
            grid=(B,),
            in_specs=[
                pl.BlockSpec((1, c_in, l_pad), lambda b: (b, 0, 0)),
                pl.BlockSpec((3, c_out, c_in), lambda b: (0, 0, 0)),
                pl.BlockSpec((3, c_out, 1), lambda b: (0, 0, 0)),
            ],
            out_specs=pl.BlockSpec((1, c_out, l_pad), lambda b: (b, 0, 0)),
        ),
        compiler_params=pltpu.CompilerParams(
            dimension_semantics=("parallel",),
            vmem_limit_bytes=vmem_limit,
        ),
    )(x_in, w_taps, params)

    return out if l_pad == L else out[:, :, :L]


def _reference(x_ncl, w_oik, bias, gamma, beta, *, groups=1, eps=1e-5):
    """Pure-JAX reference matching PyTorch ConvBlock semantics."""
    y = lax.conv_general_dilated(
        x_ncl.astype(jnp.float32), w_oik.astype(jnp.float32),
        window_strides=(1,), padding=((1, 1),),
        dimension_numbers=("NCH", "OIH", "NCH"))
    y = y + bias.reshape(1, -1, 1)
    B, C, L = y.shape
    yg = y.reshape(B, groups, C // groups, L)
    mean = jnp.mean(yg, axis=(2, 3), keepdims=True)
    var = jnp.mean((yg - mean) ** 2, axis=(2, 3), keepdims=True)
    yn = ((yg - mean) * lax.rsqrt(var + eps)).reshape(B, C, L)
    yn = yn * gamma.reshape(1, -1, 1) + beta.reshape(1, -1, 1)
    return yn * jax.nn.sigmoid(yn)


if __name__ == "__main__":
    key = jax.random.PRNGKey(0)

    def run_case(B, dim, dim_out, L, groups, mxu_dtype=None, atol=1e-3, rtol=1e-3):
        ks = jax.random.split(
            jax.random.fold_in(key, 10000 * dim_out + 100 * groups + L), 5)
        x = jax.random.normal(ks[0], (B, dim, L), dtype=jnp.float32)       # NCL
        w = jax.random.normal(ks[1], (dim_out, dim, 3), dtype=jnp.float32) * 0.3
        bias = jax.random.normal(ks[2], (dim_out,), dtype=jnp.float32) * 0.1
        gamma = 1.0 + 0.1 * jax.random.normal(ks[3], (dim_out,), dtype=jnp.float32)
        beta = 0.1 * jax.random.normal(ks[4], (dim_out,), dtype=jnp.float32)

        out = conv_block_forward(x, w, bias, gamma, beta, groups=groups,
                                 mxu_dtype=mxu_dtype)
        out = jax.block_until_ready(out)

        ref = _reference(x, w, bias, gamma, beta, groups=groups)
        assert out.shape == (B, dim_out, L)
        assert jnp.allclose(out, ref, atol=atol, rtol=rtol), (
            f"mismatch vs reference (groups={groups}, L={L}, mxu_dtype={mxu_dtype})")

    # Module-default shapes: batch=2, dim=4, dim_out=8, seq=16, groups=1
    # (exercises the L-padding + masked-stats path).
    run_case(2, 4, 8, 16, 1)
    # Grouped-norm path (per-group static normalize loop): groups=2.
    run_case(2, 4, 16, 16, 2)
    # Exact lane multiple (no padding) -> exercises the roll wrap-around masks.
    run_case(2, 4, 8, 128, 1)
    # bf16 MXU feed (v6e / v7x fast path); looser tolerance for bf16 operands.
    run_case(2, 4, 8, 16, 1, mxu_dtype=jnp.bfloat16, atol=5e-2, rtol=5e-2)

    print("KERNEL_OK")
</pallas_src>

<mosaic_0001>
module attributes {stable_mosaic.version = 11 : i64} {
  func.func @_conv_block_kernel(%arg0: i32, %arg1: memref<1x4x128xf32, #tpu.memory_space<vmem>>, %arg2: memref<3x8x4xf32, #tpu.memory_space<vmem>>, %arg3: memref<3x8x1xf32, #tpu.memory_space<vmem>>, %arg4: memref<1x8x128xf32, #tpu.memory_space<vmem>>) attributes {dimension_semantics = [#tpu.dimension_semantics<parallel>], iteration_bounds = array<i64: 2>, scalar_prefetch = 0 : i64, scratch_operands = 0 : i64, tpu.core_type = #tpu.core_type<tc>, window_params = [{transform_indices = @transform_0, window_bounds = array<i64: 1, 4, 128>}, {pipeline_mode = #tpu.pipeline_mode<synchronous>, transform_indices = @transform_1, window_bounds = array<i64: 3, 8, 4>}, {pipeline_mode = #tpu.pipeline_mode<synchronous>, transform_indices = @transform_2, window_bounds = array<i64: 3, 8, 1>}, {transform_indices = @transform_3, window_bounds = array<i64: 1, 8, 128>}]} {
    %c0 = arith.constant 0 : index
    %c0_0 = arith.constant 0 : index
    %c0_1 = arith.constant 0 : index
    %0 = vector.load %arg1[%c0, %c0_0, %c0_1] : memref<1x4x128xf32, #tpu.memory_space<vmem>>, vector<1x4x128xf32>
    %1 = vector.shape_cast %0 : vector<1x4x128xf32> to vector<4x128xf32>
    %2 = tpu.iota {dimensions = array<i32: 1>} : vector<4x128xi32>
    %c0_i32 = arith.constant 0 : i32
    %3 = vector.broadcast %c0_i32 : i32 to vector<4x128xi32>
    %4 = arith.cmpi eq, %2, %3 : vector<4x128xi32>
    %c1_i32 = arith.constant 1 : i32
    %5 = tpu.dynamic_rotate %1 by %c1_i32 dim 1 : vector<4x128xf32>, i32 -> vector<4x128xf32>
    %cst = arith.constant 0.000000e+00 : f32
    %6 = vector.broadcast %cst : f32 to vector<4x128xf32>
    %7 = arith.select %4, %6, %5 : vector<4x128xi1>, vector<4x128xf32>
    %c15_i32 = arith.constant 15 : i32
    %8 = vector.broadcast %c15_i32 : i32 to vector<4x128xi32>
    %9 = arith.cmpi eq, %2, %8 : vector<4x128xi32>
    %c127_i32 = arith.constant 127 : i32
    %10 = tpu.dynamic_rotate %1 by %c127_i32 dim 1 : vector<4x128xf32>, i32 -> vector<4x128xf32>
    %cst_2 = arith.constant 0.000000e+00 : f32
    %11 = vector.broadcast %cst_2 : f32 to vector<4x128xf32>
    %12 = arith.select %9, %11, %10 : vector<4x128xi1>, vector<4x128xf32>
    %c0_3 = arith.constant 0 : index
    %c0_4 = arith.constant 0 : index
    %c0_5 = arith.constant 0 : index
    %13 = vector.load %arg2[%c0_3, %c0_4, %c0_5] : memref<3x8x4xf32, #tpu.memory_space<vmem>>, vector<1x8x4xf32>
    %14 = vector.shape_cast %13 : vector<1x8x4xf32> to vector<8x4xf32>
    %cst_6 = arith.constant dense<0.000000e+00> : vector<8x128xf32>
    %15 = tpu.matmul %14, %7, %cst_6 {dimension_numbers = #tpu.dot_dimension_numbers<[1], [0], [0], [1], [0, 0, 1, 1], [], []>} : vector<8x4xf32>, vector<4x128xf32>, vector<8x128xf32> -> vector<8x128xf32>
    %c1 = arith.constant 1 : index
    %c0_7 = arith.constant 0 : index
    %c0_8 = arith.constant 0 : index
    %16 = vector.load %arg2[%c1, %c0_7, %c0_8] : memref<3x8x4xf32, #tpu.memory_space<vmem>>, vector<1x8x4xf32>
    %17 = vector.shape_cast %16 : vector<1x8x4xf32> to vector<8x4xf32>
    %cst_9 = arith.constant dense<0.000000e+00> : vector<8x128xf32>
    %18 = tpu.matmul %17, %1, %cst_9 {dimension_numbers = #tpu.dot_dimension_numbers<[1], [0], [0], [1], [0, 0, 1, 1], [], []>} : vector<8x4xf32>, vector<4x128xf32>, vector<8x128xf32> -> vector<8x128xf32>
    %19 = arith.addf %15, %18 : vector<8x128xf32>
    %c2 = arith.constant 2 : index
    %c0_10 = arith.constant 0 : index
    %c0_11 = arith.constant 0 : index
    %20 = vector.load %arg2[%c2, %c0_10, %c0_11] : memref<3x8x4xf32, #tpu.memory_space<vmem>>, vector<1x8x4xf32>
    %21 = vector.shape_cast %20 : vector<1x8x4xf32> to vector<8x4xf32>
    %cst_12 = arith.constant dense<0.000000e+00> : vector<8x128xf32>
    %22 = tpu.matmul %21, %12, %cst_12 {dimension_numbers = #tpu.dot_dimension_numbers<[1], [0], [0], [1], [0, 0, 1, 1], [], []>} : vector<8x4xf32>, vector<4x128xf32>, vector<8x128xf32> -> vector<8x128xf32>
    %23 = arith.addf %19, %22 : vector<8x128xf32>
    %c0_13 = arith.constant 0 : index
    %c0_14 = arith.constant 0 : index
    %c0_15 = arith.constant 0 : index
    %24 = vector.load %arg3[%c0_13, %c0_14, %c0_15] : memref<3x8x1xf32, #tpu.memory_space<vmem>>, vector<1x8x1xf32>
    %25 = vector.shape_cast %24 : vector<1x8x1xf32> to vector<8x1xf32>
    %c1_16 = arith.constant 1 : index
    %c0_17 = arith.constant 0 : index
    %c0_18 = arith.constant 0 : index
    %26 = vector.load %arg3[%c1_16, %c0_17, %c0_18] : memref<3x8x1xf32, #tpu.memory_space<vmem>>, vector<1x8x1xf32>
    %27 = vector.shape_cast %26 : vector<1x8x1xf32> to vector<8x1xf32>
    %c2_19 = arith.constant 2 : index
    %c0_20 = arith.constant 0 : index
    %c0_21 = arith.constant 0 : index
    %28 = vector.load %arg3[%c2_19, %c0_20, %c0_21] : memref<3x8x1xf32, #tpu.memory_space<vmem>>, vector<1x8x1xf32>
    %29 = vector.shape_cast %28 : vector<1x8x1xf32> to vector<8x1xf32>
    %30 = vector.broadcast %25 : vector<8x1xf32> to vector<8x128xf32>
    %31 = arith.addf %23, %30 : vector<8x128xf32>
    %32 = tpu.iota {dimensions = array<i32: 1>} : vector<8x128xi32>
    %c16_i32 = arith.constant 16 : i32
    %33 = vector.broadcast %c16_i32 : i32 to vector<8x128xi32>
    %34 = arith.cmpi slt, %32, %33 : vector<8x128xi32>
    %cst_22 = arith.constant 0.000000e+00 : f32
    %35 = vector.broadcast %cst_22 : f32 to vector<8x128xf32>
    %36 = arith.select %34, %31, %35 : vector<8x128xi1>, vector<8x128xf32>
    %cst_23 = arith.constant dense<0.000000e+00> : vector<8xf32>
    %37 = vector.multi_reduction <add>, %36, %cst_23 [1] : vector<8x128xf32> to vector<8xf32>
    %38 = vector.shape_cast %37 : vector<8xf32> to vector<8x1xf32>
    %39 = arith.mulf %36, %36 : vector<8x128xf32>
    %cst_24 = arith.constant dense<0.000000e+00> : vector<8xf32>
    %40 = vector.multi_reduction <add>, %39, %cst_24 [1] : vector<8x128xf32> to vector<8xf32>
    %41 = vector.shape_cast %40 : vector<8xf32> to vector<8x1xf32>
    %cst_25 = arith.constant dense<0.000000e+00> : vector<1xf32>
    %42 = vector.multi_reduction <add>, %38, %cst_25 [0] : vector<8x1xf32> to vector<1xf32>
    %43 = vector.shape_cast %42 : vector<1xf32> to vector<1x1xf32>
    %cst_26 = arith.constant 7.812500e-03 : f32
    %44 = vector.broadcast %cst_26 : f32 to vector<1x1xf32>
    %45 = arith.mulf %43, %44 : vector<1x1xf32>
    %cst_27 = arith.constant dense<0.000000e+00> : vector<1xf32>
    %46 = vector.multi_reduction <add>, %41, %cst_27 [0] : vector<8x1xf32> to vector<1xf32>
    %47 = vector.shape_cast %46 : vector<1xf32> to vector<1x1xf32>
    %cst_28 = arith.constant 7.812500e-03 : f32
    %48 = vector.broadcast %cst_28 : f32 to vector<1x1xf32>
    %49 = arith.mulf %47, %48 : vector<1x1xf32>
    %50 = arith.mulf %45, %45 : vector<1x1xf32>
    %51 = arith.subf %49, %50 : vector<1x1xf32>
    %cst_29 = arith.constant 0.000000e+00 : f32
    %52 = vector.broadcast %cst_29 : f32 to vector<1x1xf32>
    %53 = arith.maximumf %51, %52 : vector<1x1xf32>
    %cst_30 = arith.constant 9.99999974E-6 : f32
    %54 = vector.broadcast %cst_30 : f32 to vector<1x1xf32>
    %55 = arith.addf %53, %54 : vector<1x1xf32>
    %56 = math.rsqrt %55 : vector<1x1xf32>
    %57 = vector.broadcast %56 : vector<1x1xf32> to vector<8x1xf32>
    %58 = arith.mulf %27, %57 : vector<8x1xf32>
    %59 = vector.broadcast %45 : vector<1x1xf32> to vector<8x1xf32>
    %60 = arith.mulf %59, %58 : vector<8x1xf32>
    %61 = arith.subf %29, %60 : vector<8x1xf32>
    %62 = vector.broadcast %58 : vector<8x1xf32> to vector<8x128xf32>
    %63 = arith.mulf %31, %62 : vector<8x128xf32>
    %64 = vector.broadcast %61 : vector<8x1xf32> to vector<8x128xf32>
    %65 = arith.addf %63, %64 : vector<8x128xf32>
    %66 = arith.negf %65 : vector<8x128xf32>
    %67 = math.exp %66 : vector<8x128xf32>
    %cst_31 = arith.constant 1.000000e+00 : f32
    %68 = vector.broadcast %cst_31 : f32 to vector<8x128xf32>
    %69 = arith.addf %68, %67 : vector<8x128xf32>
    %70 = arith.divf %68, %69 : vector<8x128xf32>
    %71 = arith.mulf %65, %70 : vector<8x128xf32>
    %c0_32 = arith.constant 0 : index
    %c0_33 = arith.constant 0 : index
    %c0_34 = arith.constant 0 : index
    %72 = vector.load %arg4[%c0_32, %c0_33, %c0_34] : memref<1x8x128xf32, #tpu.memory_space<vmem>>, vector<1x8x128xf32>
    %73 = vector.shape_cast %72 : vector<1x8x128xf32> to vector<8x128xf32>
    %74 = vector.shape_cast %71 : vector<8x128xf32> to vector<1x8x128xf32>
    tpu.vector_store %arg4[%c0_32, %c0_33, %c0_34], %74 {strides = array<i32>} : memref<1x8x128xf32, #tpu.memory_space<vmem>>, vector<1x8x128xf32>,
    return
  }
  func.func @transform_0(%arg0: i32) -> (i32, i32, i32) {
    %c0_i32 = arith.constant 0 : i32
    %c0_i32_0 = arith.constant 0 : i32
    %c0_i32_1 = arith.constant 0 : i32
    return %arg0, %c0_i32, %c0_i32_0 : i32, i32, i32
  }
  func.func @transform_1(%arg0: i32) -> (i32, i32, i32) {
    %c0_i32 = arith.constant 0 : i32
    %c0_i32_0 = arith.constant 0 : i32
    %c0_i32_1 = arith.constant 0 : i32
    %c0_i32_2 = arith.constant 0 : i32
    return %c0_i32, %c0_i32_0, %c0_i32_1 : i32, i32, i32
  }
  func.func @transform_2(%arg0: i32) -> (i32, i32, i32) {
    %c0_i32 = arith.constant 0 : i32
    %c0_i32_0 = arith.constant 0 : i32
    %c0_i32_1 = arith.constant 0 : i32
    %c0_i32_2 = arith.constant 0 : i32
    return %c0_i32, %c0_i32_0, %c0_i32_1 : i32, i32, i32
  }
  func.func @transform_3(%arg0: i32) -> (i32, i32, i32) {
    %c0_i32 = arith.constant 0 : i32
    %c0_i32_0 = arith.constant 0 : i32
    %c0_i32_1 = arith.constant 0 : i32
    return %arg0, %c0_i32, %c0_i32_0 : i32, i32, i32
  }
}

</mosaic_0001>

<llo_original>
// kernel: tpu_custom_call.1
$region0: #{tpu_custom_call.1}
  #allocation0 [shape = 'u32[]', space=smem, size = 0x4, offset = 0x4, fixed_abs, tag = 'smem constant byte address 0x4 - core index']
  #allocation1 [shape = 'u32[144,128]{1,0:T(1,128)}', space=vmem, size = 0x12000, scoped, tag = 'internal scratch']
  %s0 = inlined_call_operand.vmem [shape: f32[2,4,128], index: 0, kind: input, shape index: {}]
  %s1 = inlined_call_operand.vmem [shape: f32[3,8,4], index: 1, kind: input, shape index: {}]
  %s2 = inlined_call_operand.vmem [shape: f32[3,8,1], index: 2, kind: input, shape index: {}]
  %s3 = inlined_call_operand.hbm [shape: f32[2,8,128], index: 3, kind: output, shape index: {}]
  %s4 = sld [smem:[#allocation0]]
  $region45: #{tpu_custom_call.1} parent=0
    _
  %s6 = ssub.s32 1, %s4
  %s7 = scalar_select 0, %s6, %s4
  $region1: #{tpu_custom_call.1} parent=0
    #allocation2 [shape = 'u8[8192]{0}', space=vmem, size = 0x2000, scoped, tag = 'output window, operand 0']
    #allocation3 [shape = 's32[2]{0}', space=sflag, size = 0x8, scoped, tag = 'scoped memory for tpu_custom_call.1']
    %8 = vsyncpa [#allocation3], 0
    %s9 = scalar_lea.sflag [#allocation3], 1
    %10 = vsyncpa %s9, 0
    loop: start=0, step=1, limit=4
    $region2: #{tpu_custom_call.1} parent=1 // loop_pre_header
      _
    $region3: #{tpu_custom_call.1} parent=1 // loop_header
      %s12 = sphi 0, %s16
      %p13 = scmp.ge.s32.totalorder %s12, 4
      %s22 = sphi 0, %s24
      %s25 = sphi 0, %s22
      %s26 = sphi 0, %s25
      %s42 = sphi 0, %s26
      %s46 = sphi 0, %s46
      %s48 = sphi 0, %s46
      %s49 = sphi 0, %s48
      %s63 = sphi 0, %s49
      %s67 = sphi 0, %s67
      %s69 = sphi 0, %s67
      %s70 = sphi 0, %s69
      %s84 = sphi 0, %s70
      %s90 = sphi 0, %s92
      %s93 = sphi 0, %s90
      %s94 = sphi 0, %s93
      %s110 = sphi 0, %s94
    $region4: #{tpu_custom_call.1} parent=1 // loop_header_branch
      %15 = sbr.rel (%p13) target = $region8
    $region5: #{tpu_custom_call.1} parent=1 // loop_body
      %s17 = ssub.s32 %s12, 1
      %s18 = ssub.s32 %s12, 2
      %s19 = sadd.s32 %s12, 1
      %s20 = ssub.s32 %s12, %s19
      %p21 = scmp.eq.s32.totalorder %s20, 0
      %s23 = sadd.s32 %s22, 1
      %s24 = scalar_select %p21, %s22, %s23
      %p27 = pneg %p21
      %p28 = scmp.eq.s32.totalorder %s12, 1
      %p29 = por %p27, %p28
      %p30 = scmp.ne.s32.totalorder %s22, %s25
      %p31 = scmp.eq.s32.totalorder %s12, 0
      %p32 = por %p30, %p31
      %p33 = scmp.ne.s32.totalorder %s22, %s25
      %p34 = scmp.eq.s32.totalorder %s17, 1
      %p35 = por %p33, %p34
      %p36 = scmp.ne.s32.totalorder %s25, %s26
      %p37 = scmp.eq.s32.totalorder %s17, 0
      %p38 = por %p36, %p37
      %p39 = scmp.ne.s32.totalorder %s25, %s26
      %p40 = scmp.eq.s32.totalorder %s18, 1
      %p41 = por %p39, %p40
      %p43 = scmp.ne.s32.totalorder %s26, %s42
      %p44 = scmp.eq.s32.totalorder %s18, 0
      %p45 = por %p43, %p44
      %s47 = sadd.s32 %s46, 1
      %p50 = scmp.eq.s32.totalorder %s12, 1
      %p51 = scmp.ne.s32.totalorder %s46, %s48
      %p52 = scmp.eq.s32.totalorder %s12, 0
      %p53 = por %p51, %p52
      %p54 = scmp.ne.s32.totalorder %s46, %s48
      %p55 = scmp.eq.s32.totalorder %s17, 1
      %p56 = por %p54, %p55
      %p57 = scmp.ne.s32.totalorder %s48, %s49
      %p58 = scmp.eq.s32.totalorder %s17, 0
      %p59 = por %p57, %p58
      %p60 = scmp.ne.s32.totalorder %s48, %s49
      %p61 = scmp.eq.s32.totalorder %s18, 1
      %p62 = por %p60, %p61
      %p64 = scmp.ne.s32.totalorder %s49, %s63
      %p65 = scmp.eq.s32.totalorder %s18, 0
      %p66 = por %p64, %p65
      %s68 = sadd.s32 %s67, 1
      %p71 = scmp.eq.s32.totalorder %s12, 1
      %p72 = scmp.ne.s32.totalorder %s67, %s69
      %p73 = scmp.eq.s32.totalorder %s12, 0
      %p74 = por %p72, %p73
      %p75 = scmp.ne.s32.totalorder %s67, %s69
      %p76 = scmp.eq.s32.totalorder %s17, 1
      %p77 = por %p75, %p76
      %p78 = scmp.ne.s32.totalorder %s69, %s70
      %p79 = scmp.eq.s32.totalorder %s17, 0
      %p80 = por %p78, %p79
      %p81 = scmp.ne.s32.totalorder %s69, %s70
      %p82 = scmp.eq.s32.totalorder %s18, 1
      %p83 = por %p81, %p82
      %p85 = scmp.ne.s32.totalorder %s70, %s84
      %p86 = scmp.eq.s32.totalorder %s18, 0
      %p87 = por %p85, %p86
      %s88 = ssub.s32 %s12, %s19
      %p89 = scmp.eq.s32.totalorder %s88, 0
      %s91 = sadd.s32 %s90, 1
      %s92 = scalar_select %p89, %s90, %s91
      %p95 = pneg %p89
      %p96 = scmp.eq.s32.totalorder %s12, 1
      %p97 = por %p95, %p96
      %p98 = scmp.ne.s32.totalorder %s90, %s93
      %p99 = scmp.eq.s32.totalorder %s12, 0
      %p100 = por %p98, %p99
      %p101 = scmp.ne.s32.totalorder %s90, %s93
      %p102 = scmp.eq.s32.totalorder %s17, 1
      %p103 = por %p101, %p102
      %p104 = scmp.ne.s32.totalorder %s93, %s94
      %p105 = scmp.eq.s32.totalorder %s17, 0
      %p106 = por %p104, %p105
      %p107 = scmp.ne.s32.totalorder %s93, %s94
      %p108 = scmp.eq.s32.totalorder %s18, 1
      %p109 = por %p107, %p108
      %p111 = scmp.ne.s32.totalorder %s94, %s110
      %p112 = scmp.eq.s32.totalorder %s18, 0
      %p113 = por %p111, %p112
      %p114 = scmp.le.s32.totalorder 1, %s12
      %p115 = scmp.lt.s32.totalorder %s12, 3
      %p116 = pnand %p114, %p115
      %p117 = pneg %p116
      // Predicated region
      $region9: #{tpu_custom_call.1} parent=5 // pred_check
        _
      $region10: #{tpu_custom_call.1} parent=5 // pred_check_branch
        %119 = sbr.rel (%p116) target = $region12
      $region11: #{tpu_custom_call.1} parent=5 // pred_region
        %s120 = ssub.s32 %s12, 1
        // Predicated region
        $region13: #{tpu_custom_call.1} parent=11 // pred_check
          %p121 = pneg %p59
        $region14: #{tpu_custom_call.1} parent=11 // pred_check_branch
          %123 = sbr.rel (%p121) target = $region16
        $region15: #{tpu_custom_call.1} parent=11 // pred_region
          _
        $region16: #{tpu_custom_call.1} parent=11 // pred_fallthru
          _
        // Predicated region
        $region17: #{tpu_custom_call.1} parent=11 // pred_check
          %p124 = pneg %p80
        $region18: #{tpu_custom_call.1} parent=11 // pred_check_branch
          %126 = sbr.rel (%p124) target = $region20
        $region19: #{tpu_custom_call.1} parent=11 // pred_region
          _
        $region20: #{tpu_custom_call.1} parent=11 // pred_fallthru
          _
      $region12: #{tpu_custom_call.1} parent=5 // pred_fallthru
        _
      %p127 = scmp.lt.s32.totalorder %s12, 2
      // Predicated region
      $region21: #{tpu_custom_call.1} parent=5 // pred_check
        %p128 = pneg %p127
      $region22: #{tpu_custom_call.1} parent=5 // pred_check_branch
        %130 = sbr.rel (%p128) target = $region24
      $region23: #{tpu_custom_call.1} parent=5 // pred_region
        // Predicated region
        $region25: #{tpu_custom_call.1} parent=23 // pred_check
          %p131 = pneg %p32
        $region26: #{tpu_custom_call.1} parent=23 // pred_check_branch
          %133 = sbr.rel (%p131) target = $region28
        $region27: #{tpu_custom_call.1} parent=23 // pred_region
          %p134 = scmp.lt.s32.totalorder %s12, 1
          %s135 = scalar_select %p134, %s12, 1
          %s136 = smul.addr %s135, 4
          %s137 = scalar_lea.vmem %s0, %s136
        $region28: #{tpu_custom_call.1} parent=23 // pred_fallthru
          _
      $region24: #{tpu_custom_call.1} parent=5 // pred_fallthru
        _
      %p138 = scmp.le.s32.totalorder 1, %s12
      %p139 = scmp.lt.s32.totalorder %s12, 3
      %p140 = pnand %p138, %p139
      %p141 = pneg %p140
      // Predicated region
      $region29: #{tpu_custom_call.1} parent=5 // pred_check
        _
      $region30: #{tpu_custom_call.1} parent=5 // pred_check_branch
        %143 = sbr.rel (%p140) target = $region32
      $region31: #{tpu_custom_call.1} parent=5 // pred_region
        %s144 = ssub.s32 %s12, 1
        %p145 = scmp.lt.s32.totalorder %s17, 1
        %s146 = scalar_select %p145, %s17, 1
        %s147 = smul.addr %s146, 4
        %s148 = scalar_lea.vmem %s0, %s147
        %p149 = pneg %p38
        %p150 = pneg %p35
        %p151 = pneg %p59
        %p152 = pneg %p56
        %p153 = pneg %p80
        %p154 = pneg %p77
        %p155 = pneg %p106
        %p156 = pneg %p103
        %s157 = sand.u32 %s93, 1
        %s158 = scalar_lea.sflag [#allocation3], %s157
        %s159 = sand.u32 %s93, 1
        %s160 = smul.addr %s159, 8
        %s161 = scalar_lea.vmem [#allocation2], %s160
        %p162 = scmp.lt.s32.totalorder %s17, 1
        %s163 = scalar_select %p162, %s17, 1
        %s164 = smul.addr %s163, 4
        %s165 = scalar_lea.vmem %s0, %s164
        %v166 = vld [vmem:[%s165] sm:$0xf]
        %v167 = vlaneseq
        %v168 = vand.u32 %v167, 127
        %vm169 = vcmp.eq.s32.totalorder %v168, 0
        %170 = vrot.lane.b32.xlu0 %v166, 1
        %v171 = vpop.permute.xlu0 %170
        %v172 = vsel %vm169, 0.0, %v171
        %vm173 = vcmp.eq.s32.totalorder %v168, 15
        %174 = vrot.lane.b32.xlu0 %v166, 127
        %v175 = vpop.permute.xlu0 %174
        %v176 = vsel %vm173, 0.0, %v175
        %v177 = vld [vmem:[%s1] sm:$0xff]
        %s178 = scalar_lea.vmem %s1, 8
        %v179 = vld [vmem:[%s178] sm:$0xff]
        %vm180 = vcmask 31744
        %v182 = vsel %vm180, %v179, 0
        %vm184 = vcmask 1043456
        %v186 = vsel %vm184, %v166, 0
        %188 = vmatprep.subr.mxu0 0.0
        %189 = vmatpush1.msra.mxu0 %v186
        %190 = vmatprep.subr.mxu0 0.0
        %191 = vmatpush1.msra.mxu0 0.0
        %192 = vmatprep.subr.mxu0 0.0
        %193 = vmatpush1.msra.mxu0 0.0
        %194 = vmatprep.subr.mxu0 0.0
        %195 = vmatpush1.msra.mxu0 0.0
        %196 = vmatprep.subr.mxu0 0.0
        %197 = vmatpush1.msra.mxu0 0.0
        %198 = vmatprep.subr.mxu0 0.0
        %199 = vmatpush1.msra.mxu0 0.0
        %200 = vmatprep.subr.mxu0 0.0
        %201 = vmatpush1.msra.mxu0 0.0
        %202 = vmatprep.subr.mxu0 0.0
        %203 = vmatpush1.msra.mxu0 0.0
        %204 = vmatprep.subr.mxu0 0.0
        %205 = vmatpush1.msra.mxu0 0.0
        %206 = vmatprep.subr.mxu0 0.0
        %207 = vmatpush1.msra.mxu0 0.0
        %208 = vmatprep.subr.mxu0 0.0
        %209 = vmatpush1.msra.mxu0 0.0
        %210 = vmatprep.subr.mxu0 0.0
        %211 = vmatpush1.msra.mxu0 0.0
        %212 = vmatprep.subr.mxu0 0.0
        %213 = vmatpush1.msra.mxu0 0.0
        %214 = vmatprep.subr.mxu0 0.0
        %215 = vmatpush1.msra.mxu0 0.0
        %216 = vmatprep.subr.mxu0 0.0
        %217 = vmatpush1.msra.mxu0 0.0
        %218 = vmatprep.subr.mxu0 0.0
        %219 = vmatpush1.msra.mxu0 0.0
        %220 = vmatprep.subr.mxu0 0.0
        %221 = vmatpush1.msra.mxu0 0.0
        %222 = vmatprep.subr.mxu0 0.0
        %223 = vmatpush1.msra.mxu0 0.0
        %224 = vmatprep.subr.mxu0 0.0
        %225 = vmatpush1.msra.mxu0 0.0
        %226 = vmatprep.subr.mxu0 0.0
        %227 = vmatpush1.msra.mxu0 0.0
        %228 = vmatprep.subr.mxu0 0.0
        %229 = vmatpush1.msra.mxu0 0.0
        %230 = vmatprep.subr.mxu0 0.0
        %231 = vmatpush1.msra.mxu0 0.0
        %232 = vmatprep.subr.mxu0 0.0
        %233 = vmatpush1.msra.mxu0 0.0
        %234 = vmatprep.subr.mxu0 0.0
        %235 = vmatpush1.msra.mxu0 0.0
        %236 = vmatprep.subr.mxu0 0.0
        %237 = vmatpush1.msra.mxu0 0.0
        %238 = vmatprep.subr.mxu0 0.0
        %239 = vmatpush1.msra.mxu0 0.0
        %240 = vmatprep.subr.mxu0 0.0
        %241 = vmatpush1.msra.mxu0 0.0
        %242 = vmatprep.subr.mxu0 0.0
        %243 = vmatpush1.msra.mxu0 0.0
        %244 = vmatprep.subr.mxu0 0.0
        %245 = vmatpush1.msra.mxu0 0.0
        %246 = vmatprep.subr.mxu0 0.0
        %247 = vmatpush1.msra.mxu0 0.0
        %248 = vmatprep.subr.mxu0 0.0
        %249 = vmatpush1.msra.mxu0 0.0
        %250 = vmatprep.subr.mxu0 0.0
        %251 = vmatpush1.msra.mxu0 0.0
        %252 = vmatprep.mubr.f32.mxu0 0.0
        %253 = vmatmul.mubr.f32.gmra.mrb[0].mxu0 %v182
        %v254 = vpop.f32.mrb[0].mxu0
        %v255 = vadd.f32 0.0, %v254
        %v256 = vpop.f32.mrb[0].mxu0
        %257 = vdwg.mxu0
        %v259 = vsel %vm180, %v177, 0
        %v262 = vsel %vm184, %v172, 0
        %264 = vmatprep.subr.mxu0 0.0
        %265 = vmatpush1.msra.mxu0 %v262
        %266 = vmatprep.subr.mxu0 0.0
        %267 = vmatpush1.msra.mxu0 0.0
        %268 = vmatprep.subr.mxu0 0.0
        %269 = vmatpush1.msra.mxu0 0.0
        %270 = vmatprep.subr.mxu0 0.0
        %271 = vmatpush1.msra.mxu0 0.0
        %272 = vmatprep.subr.mxu0 0.0
        %273 = vmatpush1.msra.mxu0 0.0
        %274 = vmatprep.subr.mxu0 0.0
        %275 = vmatpush1.msra.mxu0 0.0
        %276 = vmatprep.subr.mxu0 0.0
        %277 = vmatpush1.msra.mxu0 0.0
        %278 = vmatprep.subr.mxu0 0.0
        %279 = vmatpush1.msra.mxu0 0.0
        %280 = vmatprep.subr.mxu0 0.0
        %281 = vmatpush1.msra.mxu0 0.0
        %282 = vmatprep.subr.mxu0 0.0
        %283 = vmatpush1.msra.mxu0 0.0
        %284 = vmatprep.subr.mxu0 0.0
        %285 = vmatpush1.msra.mxu0 0.0
        %286 = vmatprep.subr.mxu0 0.0
        %287 = vmatpush1.msra.mxu0 0.0
        %288 = vmatprep.subr.mxu0 0.0
        %289 = vmatpush1.msra.mxu0 0.0
        %290 = vmatprep.subr.mxu0 0.0
        %291 = vmatpush1.msra.mxu0 0.0
        %292 = vmatprep.subr.mxu0 0.0
        %293 = vmatpush1.msra.mxu0 0.0
        %294 = vmatprep.subr.mxu0 0.0
        %295 = vmatpush1.msra.mxu0 0.0
        %296 = vmatprep.subr.mxu0 0.0
        %297 = vmatpush1.msra.mxu0 0.0
        %298 = vmatprep.subr.mxu0 0.0
        %299 = vmatpush1.msra.mxu0 0.0
        %300 = vmatprep.subr.mxu0 0.0
        %301 = vmatpush1.msra.mxu0 0.0
        %302 = vmatprep.subr.mxu0 0.0
        %303 = vmatpush1.msra.mxu0 0.0
        %304 = vmatprep.subr.mxu0 0.0
        %305 = vmatpush1.msra.mxu0 0.0
        %306 = vmatprep.subr.mxu0 0.0
        %307 = vmatpush1.msra.mxu0 0.0
        %308 = vmatprep.subr.mxu0 0.0
        %309 = vmatpush1.msra.mxu0 0.0
        %310 = vmatprep.subr.mxu0 0.0
        %311 = vmatpush1.msra.mxu0 0.0
        %312 = vmatprep.subr.mxu0 0.0
        %313 = vmatpush1.msra.mxu0 0.0
        %314 = vmatprep.subr.mxu0 0.0
        %315 = vmatpush1.msra.mxu0 0.0
        %316 = vmatprep.subr.mxu0 0.0
        %317 = vmatpush1.msra.mxu0 0.0
        %318 = vmatprep.subr.mxu0 0.0
        %319 = vmatpush1.msra.mxu0 0.0
        %320 = vmatprep.subr.mxu0 0.0
        %321 = vmatpush1.msra.mxu0 0.0
        %322 = vmatprep.subr.mxu0 0.0
        %323 = vmatpush1.msra.mxu0 0.0
        %324 = vmatprep.subr.mxu0 0.0
        %325 = vmatpush1.msra.mxu0 0.0
        %326 = vmatprep.subr.mxu0 0.0
        %327 = vmatpush1.msra.mxu0 0.0
        %328 = vmatprep.mubr.f32.mxu0 0.0
        %329 = vmatmul.mubr.f32.gmra.mrb[0].mxu0 %v259
        %v330 = vpop.f32.mrb[0].mxu0
        %v331 = vadd.f32 %v255, %v330
        %v332 = vpop.f32.mrb[0].mxu0
        %333 = vdwg.mxu0
        %s334 = scalar_lea.vmem %s1, 16
        %v335 = vld [vmem:[%s334] sm:$0xff]
        %v337 = vsel %vm180, %v335, 0
        %v340 = vsel %vm184, %v176, 0
        %342 = vmatprep.subr.mxu0 0.0
        %343 = vmatpush1.msra.mxu0 %v340
        %344 = vmatprep.subr.mxu0 0.0
        %345 = vmatpush1.msra.mxu0 0.0
        %346 = vmatprep.subr.mxu0 0.0
        %347 = vmatpush1.msra.mxu0 0.0
        %348 = vmatprep.subr.mxu0 0.0
        %349 = vmatpush1.msra.mxu0 0.0
        %350 = vmatprep.subr.mxu0 0.0
        %351 = vmatpush1.msra.mxu0 0.0
        %352 = vmatprep.subr.mxu0 0.0
        %353 = vmatpush1.msra.mxu0 0.0
        %354 = vmatprep.subr.mxu0 0.0
        %355 = vmatpush1.msra.mxu0 0.0
        %356 = vmatprep.subr.mxu0 0.0
        %357 = vmatpush1.msra.mxu0 0.0
        %358 = vmatprep.subr.mxu0 0.0
        %359 = vmatpush1.msra.mxu0 0.0
        %360 = vmatprep.subr.mxu0 0.0
        %361 = vmatpush1.msra.mxu0 0.0
        %362 = vmatprep.subr.mxu0 0.0
        %363 = vmatpush1.msra.mxu0 0.0
        %364 = vmatprep.subr.mxu0 0.0
        %365 = vmatpush1.msra.mxu0 0.0
        %366 = vmatprep.subr.mxu0 0.0
        %367 = vmatpush1.msra.mxu0 0.0
        %368 = vmatprep.subr.mxu0 0.0
        %369 = vmatpush1.msra.mxu0 0.0
        %370 = vmatprep.subr.mxu0 0.0
        %371 = vmatpush1.msra.mxu0 0.0
        %372 = vmatprep.subr.mxu0 0.0
        %373 = vmatpush1.msra.mxu0 0.0
        %374 = vmatprep.subr.mxu0 0.0
        %375 = vmatpush1.msra.mxu0 0.0
        %376 = vmatprep.subr.mxu0 0.0
        %377 = vmatpush1.msra.mxu0 0.0
        %378 = vmatprep.subr.mxu0 0.0
        %379 = vmatpush1.msra.mxu0 0.0
        %380 = vmatprep.subr.mxu0 0.0
        %381 = vmatpush1.msra.mxu0 0.0
        %382 = vmatprep.subr.mxu0 0.0
        %383 = vmatpush1.msra.mxu0 0.0
        %384 = vmatprep.subr.mxu0 0.0
        %385 = vmatpush1.msra.mxu0 0.0
        %386 = vmatprep.subr.mxu0 0.0
        %387 = vmatpush1.msra.mxu0 0.0
        %388 = vmatprep.subr.mxu0 0.0
        %389 = vmatpush1.msra.mxu0 0.0
        %390 = vmatprep.subr.mxu0 0.0
        %391 = vmatpush1.msra.mxu0 0.0
        %392 = vmatprep.subr.mxu0 0.0
        %393 = vmatpush1.msra.mxu0 0.0
        %394 = vmatprep.subr.mxu0 0.0
        %395 = vmatpush1.msra.mxu0 0.0
        %396 = vmatprep.subr.mxu0 0.0
        %397 = vmatpush1.msra.mxu0 0.0
        %398 = vmatprep.subr.mxu0 0.0
        %399 = vmatpush1.msra.mxu0 0.0
        %400 = vmatprep.subr.mxu0 0.0
        %401 = vmatpush1.msra.mxu0 0.0
        %402 = vmatprep.subr.mxu0 0.0
        %403 = vmatpush1.msra.mxu0 0.0
        %404 = vmatprep.subr.mxu0 0.0
        %405 = vmatpush1.msra.mxu0 0.0
        %406 = vmatprep.mubr.f32.mxu0 0.0
        %407 = vmatmul.mubr.f32.gmra.mrb[0].mxu0 %v337
        %v408 = vpop.f32.mrb[0].mxu0
        %v409 = vadd.f32 0.0, %v408
        %v410 = vpop.f32.mrb[0].mxu0
        %411 = vdwg.mxu0
        %v412 = vadd.f32 %v331, %v409
        %v413 = vld [vmem:[%s2] sm:$0xff]
        %s414 = scalar_lea.vmem %s2, 8
        %v415 = vld [vmem:[%s414] sm:$0xff]
        %s416 = scalar_lea.vmem %s2, 16
        %v417 = vld [vmem:[%s416] sm:$0xff]
        %419 = vset.pattern.permute.xlu0 0
        %420 = vperm.xlu0 %419, %v413
        %v421 = vpop.permute.xlu0 %420
        %v423 = vadd.f32 %v412, %v421
        %vm424 = vcmp.lt.s32.totalorder %v168, 16
        %v425 = vsel %vm424, %v423, 0.0
        %426 = vadd.xlane.f32.xlu0 %v425
        %v427 = vpop.xlane.xlu0 %426
        %v428 = vmul.f32 %v425, %v425
        %429 = vadd.xlane.f32.xlu0 %v428
        %v430 = vpop.xlane.xlu0 %429
        %v431 = vrot.slane %v427, 4
        %v432 = vadd.f32 %v427, %v431
        %v433 = vrot.slane %v432, 2
        %v434 = vadd.f32 %v432, %v433
        %v435 = vrot.slane %v434, 1
        %v436 = vadd.f32 %v434, %v435
        %v437 = vmul.f32 %v436, 0.0078125
        %v438 = vrot.slane %v430, 4
        %v439 = vadd.f32 %v430, %v438
        %v440 = vrot.slane %v439, 2
        %v441 = vadd.f32 %v439, %v440
        %v442 = vrot.slane %v441, 1
        %v443 = vadd.f32 %v441, %v442
        %v444 = vmul.f32 %v443, 0.0078125
        %v445 = vmul.f32 %v437, %v437
        %v446 = vsub.f32 %v444, %v445
        %v447 = vmax.f32 %v446, 0.0
        %v448 = vadd.f32 %v447, 1e-05
        %v449 = vrsqrt.pop %v448
        %v450 = vmul.f32 %v415, %v449
        %v451 = vmul.f32 %v437, %v450
        %v452 = vsub.f32 %v417, %v451
        %454 = vset.pattern.permute.xlu0 0
        %455 = vperm.xlu0 %454, %v450
        %v456 = vpop.permute.xlu0 %455
        %v458 = vmul.f32 %v423, %v456
        %460 = vset.pattern.permute.xlu0 0
        %461 = vperm.xlu0 %460, %v452
        %v462 = vpop.permute.xlu0 %461
        %v464 = vadd.f32 %v458, %v462
        %v465 = vxor.u32 %v464, 2147483648
        %v466 = vmul.f32 %v465, 1.442695
        %v467 = vpow.pop %v466
        %v468 = vadd.f32 %v467, 1.0
        %v469 = vrcp.pop %v468
        %v470 = vmul.f32 1.0, %v469
        %v471 = vmul.f32 %v464, %v470
        %472 = vst [vmem:[%s161] sm:$0xff] %v471
        %s473 = sand.u32 %s93, 1
        %s474 = scalar_lea.sflag [#allocation3], %s473
        %s475 = sand.u32 %s93, 1
        %s476 = smul.addr %s475, 8
        %s477 = scalar_lea.vmem [#allocation2], %s476
        // Predicated region
        $region33: #{tpu_custom_call.1} parent=31 // pred_check
          %p478 = pneg %p103
        $region34: #{tpu_custom_call.1} parent=31 // pred_check_branch
          %480 = sbr.rel (%p478) target = $region36
        $region35: #{tpu_custom_call.1} parent=31 // pred_region
          %s482 = ssub.s32 128, 128
          %483 = vsyncadd %s474, %s482
          %s484 = smul.addr %s17, 128
          %s485 = scalar_lea.hbm %s3, %s484
          %s487 = sshll.u32 %s477, 4
          %s488 = int_to_ptr.vmem [resolvable:$true] %s487
          %490 = dma.vmem_to_hbm [thread:$0]  %s488, 128, %s485, %s474
        $region36: #{tpu_custom_call.1} parent=31 // pred_fallthru
          _
      $region32: #{tpu_custom_call.1} parent=5 // pred_fallthru
        _
      %p491 = scmp.le.s32.totalorder 2, %s12
      // Predicated region
      $region37: #{tpu_custom_call.1} parent=5 // pred_check
        %p492 = pneg %p491
      $region38: #{tpu_custom_call.1} parent=5 // pred_check_branch
        %494 = sbr.rel (%p492) target = $region40
      $region39: #{tpu_custom_call.1} parent=5 // pred_region
        %s495 = ssub.s32 %s12, 2
        // Predicated region
        $region41: #{tpu_custom_call.1} parent=39 // pred_check
          %p496 = pneg %p109
        $region42: #{tpu_custom_call.1} parent=39 // pred_check_branch
          %498 = sbr.rel (%p496) target = $region44
        $region43: #{tpu_custom_call.1} parent=39 // pred_region
          %s499 = sand.u32 %s94, 1
          %s500 = scalar_lea.sflag [#allocation3], %s499
          %s501 = sand.u32 %s94, 1
          %s502 = smul.addr %s501, 8
          %s503 = scalar_lea.vmem [#allocation2], %s502
          %504 = dma.done %s500, 128
        $region44: #{tpu_custom_call.1} parent=39 // pred_fallthru
          _
      $region40: #{tpu_custom_call.1} parent=5 // pred_fallthru
        _
    $region6: #{tpu_custom_call.1} parent=1 // loop_footer
      %s16 = sadd.s32 1, %s12
    $region7: #{tpu_custom_call.1} parent=1 // loop_footer_branch
      %11 = sbr.rel target = $region3
    $region8: #{tpu_custom_call.1} parent=1 // loop_exit
      _
    %505 = vsyncpa [#allocation3], 1
    %s506 = scalar_lea.sflag [#allocation3], 1
    %507 = vsyncpa %s506, 1

</llo_original>
